<compile_context>
chip_gen: v5e
topology: v5e:2x2
jax: 0.10.0
libtpu: 0.0.40
codegen_flags: <defaults>
</compile_context>

<pallas_src>
import functools

import jax
import jax.numpy as jnp
from jax.experimental import pallas as pl
from jax.experimental.pallas import tpu as pltpu


def _round_up(n, m):
    return ((n + m - 1) // m) * m


def _vmem_capacity_bytes():
    try:
        return int(pltpu.get_tpu_info().vmem_capacity_bytes)
    except Exception:
        return 64 * 1024 * 1024  # conservative (v7x-sized) fallback


def prepare_layer_scale_params(gamma, beta, w, b, alpha):
    """Fold LayerNorm affine (gamma/beta) and layer-scale alpha into the Linear.

    Call ONCE at model init (O(D^2)); never on the per-forward path.

      out = x + alpha * ((xn * gamma + beta) @ W + b)
          = x + xn @ (gamma[:, None] * W * alpha[None, :]) + alpha * (beta @ W + b)

    Returns (w_fold bf16 (D, D) stored (in, out), b_fold f32 (1, D)).
    """
    gamma = gamma.astype(jnp.float32)
    beta = beta.astype(jnp.float32)
    w32 = w.astype(jnp.float32)
    b32 = b.astype(jnp.float32)
    alpha = alpha.astype(jnp.float32)
    w_fold = (gamma[:, None] * w32 * alpha[None, :]).astype(jnp.bfloat16)
    b_fold = (alpha * (beta @ w32 + b32))[None, :]
    return w_fold, b_fold


def _layer_scale_kernel(x_ref, w_ref, b_ref, o_ref, *, inv_dim):
    # x_ref: (tm, D) f32    w_ref: (D, D) bf16    b_ref: (1, D) f32
    x = x_ref[...].astype(jnp.float32)

    # Two-pass LayerNorm statistics (mean subtracted before the variance
    # reduction -> no E[x^2]-mean^2 cancellation), eps = 1e-5 (nn.LayerNorm).
    mean = jnp.sum(x, axis=-1, keepdims=True) * inv_dim
    xc = x - mean
    var = jnp.sum(xc * xc, axis=-1, keepdims=True) * inv_dim
    xn = xc * jax.lax.rsqrt(var + 1e-5)

    # core_block Linear with gamma/beta/alpha pre-folded into w/b:
    # bf16 MXU operands, f32 accumulation.
    t = jnp.dot(xn.astype(jnp.bfloat16), w_ref[...],
                preferred_element_type=jnp.float32) + b_ref[...]

    # Residual add (PathDropout(0.0) is identity at inference).
    o_ref[...] = (x + t).astype(o_ref.dtype)


def layer_scale_forward(x, w_fold, b_fold, *, tm=None):
    """Fused LayerScale forward.

    x: (B, S, D).  w_fold / b_fold: outputs of prepare_layer_scale_params.
    Returns (x + alpha * Linear(LayerNorm(x)), empty) like the torch module.
    """
    B, S, D = x.shape
    N = B * S
    vmem_cap = _vmem_capacity_bytes()

    if tm is None:
        # 512-row tiles on 128 MiB-VMEM parts (v5e/v6e) for moderate D,
        # 256 otherwise (v7x has 64 MiB physical VMEM).
        tm = 512 if (vmem_cap >= 96 * 1024 * 1024 and D <= 2048) else 256
    tm = min(tm, _round_up(N, 8))
    if tm >= N and N > 8:
        # Split so the "parallel" grid axis has >= 2 steps (both v7x TCs busy).
        tm = max(8, _round_up(pl.cdiv(N, 2), 8))
    grid_rows = pl.cdiv(N, tm)  # partial last tile handled by Pallas (masked writeback)

    # VMEM budget: 1x weight + 1x bias (single-buffered) + 2x in + 2x out tiles.
    need = D * D * 2 + D * 4 + 4 * tm * D * 4
    vmem_limit = max(32 * 1024 * 1024,
                     min(int(need * 1.25) + 4 * 1024 * 1024, vmem_cap * 3 // 4))

    kernel = functools.partial(_layer_scale_kernel, inv_dim=1.0 / D)

    out = pl.pallas_call(
        kernel,
        out_shape=jax.ShapeDtypeStruct((N, D), x.dtype),
        grid_spec=pltpu.PrefetchScalarGridSpec(
            num_scalar_prefetch=0,
            grid=(grid_rows,),
            in_specs=[
                pl.BlockSpec((tm, D), lambda i: (i, 0)),       # x row tile
                pl.BlockSpec((D, D), lambda i: (0, 0),         # folded weight (grid-invariant
                             pipeline_mode=pl.Buffered(1)),    #   -> single-buffered)
                pl.BlockSpec((1, D), lambda i: (0, 0),         # folded bias
                             pipeline_mode=pl.Buffered(1)),
            ],
            out_specs=pl.BlockSpec((tm, D), lambda i: (i, 0)),
        ),
        compiler_params=pltpu.CompilerParams(
            dimension_semantics=("parallel",),
            vmem_limit_bytes=vmem_limit,
        ),
    )(x.reshape(N, D), w_fold, b_fold)

    other = jnp.empty((0,), dtype=x.dtype)  # torch.empty(0) analogue
    return out.reshape(B, S, D), other


if __name__ == "__main__":
    B, S, D = 2, 8, 32
    key = jax.random.PRNGKey(0)
    kx, kw, kb, kg, kbt = jax.random.split(key, 5)

    x = jax.random.normal(kx, (B, S, D), dtype=jnp.float32)

    # Deterministic "trained" parameters (shapes per module __init__); gamma/beta
    # deliberately non-trivial so the affine folding is actually exercised.
    gamma = 1.0 + 0.1 * jax.random.normal(kg, (D,), jnp.float32)  # LayerNorm weight
    beta = 0.05 * jax.random.normal(kbt, (D,), jnp.float32)       # LayerNorm bias
    w = jax.random.normal(kw, (D, D), jnp.float32) * 0.02         # Linear weight, stored (in, out)
    b = jax.random.normal(kb, (D,), jnp.float32) * 0.01           # Linear bias
    alpha = 1e-4 * jnp.ones((D,), jnp.float32)                    # AffineTransform alpha

    # One-time parameter folding (hoisted off the per-call path).
    w_fold, b_fold = prepare_layer_scale_params(gamma, beta, w, b, alpha)

    fwd = jax.jit(layer_scale_forward)
    out, other = fwd(x, w_fold, b_fold)
    jax.block_until_ready(out)

    # Pure-JAX f32 reference (bf16 matmul in the kernel -> modest tolerance).
    mean = x.mean(-1, keepdims=True)
    var = ((x - mean) ** 2).mean(-1, keepdims=True)
    xn = (x - mean) * jax.lax.rsqrt(var + 1e-5)
    ref = x + alpha * ((xn * gamma + beta) @ w + b)

    assert out.shape == x.shape and other.shape == (0,)
    assert jnp.allclose(out, ref, atol=1e-4, rtol=1e-4)

    print("KERNEL_OK")
</pallas_src>

<mosaic_0001>
module attributes {stable_mosaic.version = 11 : i64} {
  func.func @_layer_scale_kernel(%arg0: i32, %arg1: memref<8x32xf32, #tpu.memory_space<vmem>>, %arg2: memref<32x32xbf16, #tpu.memory_space<vmem>>, %arg3: memref<1x32xf32, #tpu.memory_space<vmem>>, %arg4: memref<8x32xf32, #tpu.memory_space<vmem>>) attributes {dimension_semantics = [#tpu.dimension_semantics<parallel>], iteration_bounds = array<i64: 2>, scalar_prefetch = 0 : i64, scratch_operands = 0 : i64, tpu.core_type = #tpu.core_type<tc>, window_params = [{transform_indices = @transform_0, window_bounds = array<i64: 8, 32>}, {pipeline_mode = #tpu.pipeline_mode<synchronous>, transform_indices = @transform_1, window_bounds = array<i64: 32, 32>}, {pipeline_mode = #tpu.pipeline_mode<synchronous>, transform_indices = @transform_2, window_bounds = array<i64: 1, 32>}, {transform_indices = @transform_3, window_bounds = array<i64: 8, 32>}]} {
    %c0 = arith.constant 0 : index
    %c0_0 = arith.constant 0 : index
    %0 = vector.load %arg1[%c0, %c0_0] : memref<8x32xf32, #tpu.memory_space<vmem>>, vector<8x32xf32>
    %cst = arith.constant dense<0.000000e+00> : vector<8xf32>
    %1 = vector.multi_reduction <add>, %0, %cst [1] : vector<8x32xf32> to vector<8xf32>
    %2 = vector.shape_cast %1 : vector<8xf32> to vector<8x1xf32>
    %cst_1 = arith.constant 3.125000e-02 : f32
    %3 = vector.broadcast %cst_1 : f32 to vector<8x1xf32>
    %4 = arith.mulf %2, %3 : vector<8x1xf32>
    %5 = vector.broadcast %4 : vector<8x1xf32> to vector<8x32xf32>
    %6 = arith.subf %0, %5 : vector<8x32xf32>
    %7 = arith.mulf %6, %6 : vector<8x32xf32>
    %cst_2 = arith.constant dense<0.000000e+00> : vector<8xf32>
    %8 = vector.multi_reduction <add>, %7, %cst_2 [1] : vector<8x32xf32> to vector<8xf32>
    %9 = vector.shape_cast %8 : vector<8xf32> to vector<8x1xf32>
    %cst_3 = arith.constant 3.125000e-02 : f32
    %10 = vector.broadcast %cst_3 : f32 to vector<8x1xf32>
    %11 = arith.mulf %9, %10 : vector<8x1xf32>
    %cst_4 = arith.constant 9.99999974E-6 : f32
    %12 = vector.broadcast %cst_4 : f32 to vector<8x1xf32>
    %13 = arith.addf %11, %12 : vector<8x1xf32>
    %14 = math.rsqrt %13 : vector<8x1xf32>
    %15 = vector.broadcast %14 : vector<8x1xf32> to vector<8x32xf32>
    %16 = arith.mulf %6, %15 : vector<8x32xf32>
    %17 = arith.truncf %16 : vector<8x32xf32> to vector<8x32xbf16>
    %c0_5 = arith.constant 0 : index
    %c0_6 = arith.constant 0 : index
    %18 = vector.load %arg2[%c0_5, %c0_6] : memref<32x32xbf16, #tpu.memory_space<vmem>>, vector<32x32xbf16>
    %cst_7 = arith.constant dense<0.000000e+00> : vector<8x32xf32>
    %19 = tpu.matmul %17, %18, %cst_7 {dimension_numbers = #tpu.dot_dimension_numbers<[1], [0], [0], [1], [0, 0, 1, 1], [], []>} : vector<8x32xbf16>, vector<32x32xbf16>, vector<8x32xf32> -> vector<8x32xf32>
    %c0_8 = arith.constant 0 : index
    %c0_9 = arith.constant 0 : index
    %20 = vector.load %arg3[%c0_8, %c0_9] : memref<1x32xf32, #tpu.memory_space<vmem>>, vector<1x32xf32>
    %21 = vector.broadcast %20 : vector<1x32xf32> to vector<8x32xf32>
    %22 = arith.addf %19, %21 : vector<8x32xf32>
    %23 = arith.addf %0, %22 : vector<8x32xf32>
    %c0_10 = arith.constant 0 : index
    %c0_11 = arith.constant 0 : index
    %24 = vector.load %arg4[%c0_10, %c0_11] : memref<8x32xf32, #tpu.memory_space<vmem>>, vector<8x32xf32>
    tpu.vector_store %arg4[%c0_10, %c0_11], %23 {strides = array<i32>} : memref<8x32xf32, #tpu.memory_space<vmem>>, vector<8x32xf32>,
    return
  }
  func.func @transform_0(%arg0: i32) -> (i32, i32) {
    %c0_i32 = arith.constant 0 : i32
    %c0_i32_0 = arith.constant 0 : i32
    return %arg0, %c0_i32 : i32, i32
  }
  func.func @transform_1(%arg0: i32) -> (i32, i32) {
    %c0_i32 = arith.constant 0 : i32
    %c0_i32_0 = arith.constant 0 : i32
    %c0_i32_1 = arith.constant 0 : i32
    return %c0_i32, %c0_i32_0 : i32, i32
  }
  func.func @transform_2(%arg0: i32) -> (i32, i32) {
    %c0_i32 = arith.constant 0 : i32
    %c0_i32_0 = arith.constant 0 : i32
    %c0_i32_1 = arith.constant 0 : i32
    return %c0_i32, %c0_i32_0 : i32, i32
  }
  func.func @transform_3(%arg0: i32) -> (i32, i32) {
    %c0_i32 = arith.constant 0 : i32
    %c0_i32_0 = arith.constant 0 : i32
    return %arg0, %c0_i32 : i32, i32
  }
}

</mosaic_0001>

<llo_original>
// kernel: layer_scale_forward.1
$region0: #{layer_scale_forward.1}
  #allocation0 [shape = 'u32[]', space=smem, size = 0x4, offset = 0x4, fixed_abs, tag = 'smem constant byte address 0x4 - core index']
  #allocation1 [shape = 'u32[72,128]{1,0:T(1,128)}', space=vmem, size = 0x9000, scoped, tag = 'internal scratch']
  %s0 = inlined_call_operand.hbm [shape: f32[16,32], index: 0, kind: input, shape index: {}]
  %s1 = inlined_call_operand.hbm [shape: bf16[32,32], index: 1, kind: input, shape index: {}]
  %s2 = inlined_call_operand.vmem [shape: f32[1,32], index: 2, kind: input, shape index: {}]
  %s3 = inlined_call_operand.hbm [shape: f32[16,32], index: 3, kind: output, shape index: {}]
  %s4 = sld [smem:[#allocation0]]
  $region53: #{layer_scale_forward.1} parent=0
    _
  %s6 = ssub.s32 1, %s4
  %s7 = scalar_select 0, %s6, %s4
  $region1: #{layer_scale_forward.1} parent=0
    #allocation2 [shape = 'u8[8192]{0}', space=vmem, size = 0x2000, scoped, tag = 'input window, operand 0']
    #allocation3 [shape = 's32[2]{0}', space=sflag, size = 0x8, scoped, tag = 'scoped memory for layer_scale_forward.1']
    #allocation4 [shape = 's32[2]{0}', space=sflag, size = 0x8, scoped, tag = 'scoped memory for layer_scale_forward.1']
    #allocation5 [shape = 'u8[8192]{0}', space=vmem, size = 0x2000, scoped, tag = 'input window, operand 1, single buffered']
    #allocation6 [shape = 's32[1]{0}', space=sflag, size = 0x4, scoped, tag = 'scoped memory for layer_scale_forward.1']
    #allocation7 [shape = 'u8[8192]{0}', space=vmem, size = 0x2000, scoped, tag = 'output window, operand 0']
    %8 = vsyncpa [#allocation3], 0
    %s9 = scalar_lea.sflag [#allocation3], 1
    %10 = vsyncpa %s9, 0
    %11 = vsyncpa [#allocation6], 0
    %12 = vsyncpa [#allocation4], 0
    %s13 = scalar_lea.sflag [#allocation4], 1
    %14 = vsyncpa %s13, 0
    loop: start=0, step=1, limit=4
    $region2: #{layer_scale_forward.1} parent=1 // loop_pre_header
      _
    $region3: #{layer_scale_forward.1} parent=1 // loop_header
      %s16 = sphi 0, %s20
      %p17 = scmp.ge.s32.totalorder %s16, 4
      %s26 = sphi 0, %s28
      %s29 = sphi 0, %s26
      %s30 = sphi 0, %s29
      %s46 = sphi 0, %s30
      %s50 = sphi 0, %s50
      %s52 = sphi 0, %s50
      %s53 = sphi 0, %s52
      %s67 = sphi 0, %s53
      %s71 = sphi 0, %s71
      %s73 = sphi 0, %s71
      %s74 = sphi 0, %s73
      %s88 = sphi 0, %s74
      %s94 = sphi 0, %s96
      %s97 = sphi 0, %s94
      %s98 = sphi 0, %s97
      %s114 = sphi 0, %s98
    $region4: #{layer_scale_forward.1} parent=1 // loop_header_branch
      %19 = sbr.rel (%p17) target = $region8
    $region5: #{layer_scale_forward.1} parent=1 // loop_body
      %s21 = ssub.s32 %s16, 1
      %s22 = ssub.s32 %s16, 2
      %s23 = sadd.s32 %s16, 1
      %s24 = ssub.s32 %s16, %s23
      %p25 = scmp.eq.s32.totalorder %s24, 0
      %s27 = sadd.s32 %s26, 1
      %s28 = scalar_select %p25, %s26, %s27
      %p31 = pneg %p25
      %p32 = scmp.eq.s32.totalorder %s16, 1
      %p33 = por %p31, %p32
      %p34 = scmp.ne.s32.totalorder %s26, %s29
      %p35 = scmp.eq.s32.totalorder %s16, 0
      %p36 = por %p34, %p35
      %p37 = scmp.ne.s32.totalorder %s26, %s29
      %p38 = scmp.eq.s32.totalorder %s21, 1
      %p39 = por %p37, %p38
      %p40 = scmp.ne.s32.totalorder %s29, %s30
      %p41 = scmp.eq.s32.totalorder %s21, 0
      %p42 = por %p40, %p41
      %p43 = scmp.ne.s32.totalorder %s29, %s30
      %p44 = scmp.eq.s32.totalorder %s22, 1
      %p45 = por %p43, %p44
      %p47 = scmp.ne.s32.totalorder %s30, %s46
      %p48 = scmp.eq.s32.totalorder %s22, 0
      %p49 = por %p47, %p48
      %s51 = sadd.s32 %s50, 1
      %p54 = scmp.eq.s32.totalorder %s16, 1
      %p55 = scmp.ne.s32.totalorder %s50, %s52
      %p56 = scmp.eq.s32.totalorder %s16, 0
      %p57 = por %p55, %p56
      %p58 = scmp.ne.s32.totalorder %s50, %s52
      %p59 = scmp.eq.s32.totalorder %s21, 1
      %p60 = por %p58, %p59
      %p61 = scmp.ne.s32.totalorder %s52, %s53
      %p62 = scmp.eq.s32.totalorder %s21, 0
      %p63 = por %p61, %p62
      %p64 = scmp.ne.s32.totalorder %s52, %s53
      %p65 = scmp.eq.s32.totalorder %s22, 1
      %p66 = por %p64, %p65
      %p68 = scmp.ne.s32.totalorder %s53, %s67
      %p69 = scmp.eq.s32.totalorder %s22, 0
      %p70 = por %p68, %p69
      %s72 = sadd.s32 %s71, 1
      %p75 = scmp.eq.s32.totalorder %s16, 1
      %p76 = scmp.ne.s32.totalorder %s71, %s73
      %p77 = scmp.eq.s32.totalorder %s16, 0
      %p78 = por %p76, %p77
      %p79 = scmp.ne.s32.totalorder %s71, %s73
      %p80 = scmp.eq.s32.totalorder %s21, 1
      %p81 = por %p79, %p80
      %p82 = scmp.ne.s32.totalorder %s73, %s74
      %p83 = scmp.eq.s32.totalorder %s21, 0
      %p84 = por %p82, %p83
      %p85 = scmp.ne.s32.totalorder %s73, %s74
      %p86 = scmp.eq.s32.totalorder %s22, 1
      %p87 = por %p85, %p86
      %p89 = scmp.ne.s32.totalorder %s74, %s88
      %p90 = scmp.eq.s32.totalorder %s22, 0
      %p91 = por %p89, %p90
      %s92 = ssub.s32 %s16, %s23
      %p93 = scmp.eq.s32.totalorder %s92, 0
      %s95 = sadd.s32 %s94, 1
      %s96 = scalar_select %p93, %s94, %s95
      %p99 = pneg %p93
      %p100 = scmp.eq.s32.totalorder %s16, 1
      %p101 = por %p99, %p100
      %p102 = scmp.ne.s32.totalorder %s94, %s97
      %p103 = scmp.eq.s32.totalorder %s16, 0
      %p104 = por %p102, %p103
      %p105 = scmp.ne.s32.totalorder %s94, %s97
      %p106 = scmp.eq.s32.totalorder %s21, 1
      %p107 = por %p105, %p106
      %p108 = scmp.ne.s32.totalorder %s97, %s98
      %p109 = scmp.eq.s32.totalorder %s21, 0
      %p110 = por %p108, %p109
      %p111 = scmp.ne.s32.totalorder %s97, %s98
      %p112 = scmp.eq.s32.totalorder %s22, 1
      %p113 = por %p111, %p112
      %p115 = scmp.ne.s32.totalorder %s98, %s114
      %p116 = scmp.eq.s32.totalorder %s22, 0
      %p117 = por %p115, %p116
      %p118 = scmp.le.s32.totalorder 1, %s16
      %p119 = scmp.lt.s32.totalorder %s16, 3
      %p120 = pnand %p118, %p119
      %p121 = pneg %p120
      // Predicated region
      $region9: #{layer_scale_forward.1} parent=5 // pred_check
        _
      $region10: #{layer_scale_forward.1} parent=5 // pred_check_branch
        %123 = sbr.rel (%p120) target = $region12
      $region11: #{layer_scale_forward.1} parent=5 // pred_region
        %s124 = ssub.s32 %s16, 1
        // Predicated region
        $region13: #{layer_scale_forward.1} parent=11 // pred_check
          %p125 = pneg %p63
        $region14: #{layer_scale_forward.1} parent=11 // pred_check_branch
          %127 = sbr.rel (%p125) target = $region16
        $region15: #{layer_scale_forward.1} parent=11 // pred_region
          %129 = vsyncadd [#allocation6], 0
          %s130 = sshll.u32 %s1, 4
          %s131 = int_to_ptr.hbm [resolvable:$true] %s130
          %s132 = sshll.u32 [#allocation5], 4
          %s133 = int_to_ptr.vmem [resolvable:$true] %s132
          %138 = dma.hbm_to_vmem [thread:$0]  %s131, 256, %s133, [#allocation6], 64, 64, 4
        $region16: #{layer_scale_forward.1} parent=11 // pred_fallthru
          _
        // Predicated region
        $region17: #{layer_scale_forward.1} parent=11 // pred_check
          %p139 = pneg %p84
        $region18: #{layer_scale_forward.1} parent=11 // pred_check_branch
          %141 = sbr.rel (%p139) target = $region20
        $region19: #{layer_scale_forward.1} parent=11 // pred_region
          _
        $region20: #{layer_scale_forward.1} parent=11 // pred_fallthru
          _
      $region12: #{layer_scale_forward.1} parent=5 // pred_fallthru
        _
      %p142 = scmp.lt.s32.totalorder %s16, 2
      // Predicated region
      $region21: #{layer_scale_forward.1} parent=5 // pred_check
        %p143 = pneg %p142
      $region22: #{layer_scale_forward.1} parent=5 // pred_check_branch
        %145 = sbr.rel (%p143) target = $region24
      $region23: #{layer_scale_forward.1} parent=5 // pred_region
        // Predicated region
        $region25: #{layer_scale_forward.1} parent=23 // pred_check
          %p146 = pneg %p36
        $region26: #{layer_scale_forward.1} parent=23 // pred_check_branch
          %148 = sbr.rel (%p146) target = $region28
        $region27: #{layer_scale_forward.1} parent=23 // pred_region
          %s149 = sand.u32 %s26, 1
          %s150 = scalar_lea.sflag [#allocation3], %s149
          %s151 = sand.u32 %s26, 1
          %s152 = smul.addr %s151, 8
          %s153 = scalar_lea.vmem [#allocation2], %s152
          %155 = vsyncadd %s150, 0
          %s156 = smul.addr %s16, 8
          %s157 = scalar_lea.hbm %s0, %s156
          %s159 = sshll.u32 %s157, 4
          %s160 = int_to_ptr.hbm [resolvable:$true] %s159
          %s161 = sshll.u32 %s153, 4
          %s162 = int_to_ptr.vmem [resolvable:$true] %s161
          %164 = dma.hbm_to_vmem [thread:$0]  %s160, 128, %s162, %s150
        $region28: #{layer_scale_forward.1} parent=23 // pred_fallthru
          _
      $region24: #{layer_scale_forward.1} parent=5 // pred_fallthru
        _
      %p165 = scmp.le.s32.totalorder 1, %s16
      %p166 = scmp.lt.s32.totalorder %s16, 3
      %p167 = pnand %p165, %p166
      %p168 = pneg %p167
      // Predicated region
      $region29: #{layer_scale_forward.1} parent=5 // pred_check
        _
      $region30: #{layer_scale_forward.1} parent=5 // pred_check_branch
        %170 = sbr.rel (%p167) target = $region32
      $region31: #{layer_scale_forward.1} parent=5 // pred_region
        %s171 = ssub.s32 %s16, 1
        %s172 = sand.u32 %s29, 1
        %s173 = scalar_lea.sflag [#allocation3], %s172
        %s174 = sand.u32 %s29, 1
        %s175 = smul.addr %s174, 8
        %s176 = scalar_lea.vmem [#allocation2], %s175
        // Predicated region
        $region33: #{layer_scale_forward.1} parent=31 // pred_check
          %p177 = pneg %p42
        $region34: #{layer_scale_forward.1} parent=31 // pred_check_branch
          %179 = sbr.rel (%p177) target = $region36
        $region35: #{layer_scale_forward.1} parent=31 // pred_region
          %181 = dma.done %s173, 128
        $region36: #{layer_scale_forward.1} parent=31 // pred_fallthru
          _
        // Predicated region
        $region37: #{layer_scale_forward.1} parent=31 // pred_check
          %p182 = pneg %p63
        $region38: #{layer_scale_forward.1} parent=31 // pred_check_branch
          %184 = sbr.rel (%p182) target = $region40
        $region39: #{layer_scale_forward.1} parent=31 // pred_region
          %186 = dma.done [#allocation6], 256
        $region40: #{layer_scale_forward.1} parent=31 // pred_fallthru
          _
        %s187 = sand.u32 %s29, 1
        %s188 = scalar_lea.sflag [#allocation3], %s187
        %s189 = sand.u32 %s29, 1
        %s190 = smul.addr %s189, 8
        %s191 = scalar_lea.vmem [#allocation2], %s190
        %p192 = pneg %p42
        %p193 = pneg %p39
        %p194 = pneg %p63
        %p195 = pneg %p60
        %p196 = pneg %p84
        %p197 = pneg %p81
        %p198 = pneg %p110
        %p199 = pneg %p107
        %s200 = sand.u32 %s97, 1
        %s201 = scalar_lea.sflag [#allocation4], %s200
        %s202 = sand.u32 %s97, 1
        %s203 = smul.addr %s202, 8
        %s204 = scalar_lea.vmem [#allocation7], %s203
        %v206 = vld [vmem:[%s176] sm:$0xff]
        %vm207 = vcmask 261120
        %v208 = vsel %vm207, %v206, 0.0
        %209 = vadd.xlane.f32.xlu0 %v208
        %v210 = vpop.xlane.xlu0 %209
        %v211 = vmul.f32 %v210, 0.03125
        %v212 = vsub.f32 %v206, %v211
        %v213 = vmul.f32 %v212, %v212
        %v214 = vsel %vm207, %v213, 0.0
        %215 = vadd.xlane.f32.xlu0 %v214
        %v216 = vpop.xlane.xlu0 %215
        %v217 = vmul.f32 %v216, 0.03125
        %v218 = vadd.f32 %v217, 1e-05
        %v219 = vrsqrt.pop %v218
        %v220 = vmul.f32 %v219, %v218
        %v221 = vmul.f32 %v220, %v219
        %v222 = vmul.f32 0.5, %v221
        %v223 = vsub.f32 1.5, %v222
        %v224 = vmul.f32 %v219, %v223
        %vm225 = vweird.f32 %v218
        %vm226 = vweird.f32 %v219
        %vm227 = vmor %vm225, %vm226
        %v228 = vsel %vm227, %v219, %v224
        %v229 = vmul.f32 %v212, %v228
        %v230 = vpack.c.bf16 %v229, %v229
        %v231 = vld [vmem:[#allocation5] sm:$0xf]
        %v232 = vld [vmem:[#allocation5 + $0x4] sm:$0xf]
        %v233 = vld [vmem:[#allocation5 + $0x8] sm:$0xf]
        %v234 = vld [vmem:[#allocation5 + $0xc] sm:$0xf]
        %v235 = vld [vmem:[%s2] sm:$0x1]
        %v237 = vperm.slane %v235, 0
        %v243 = vunpack.c.l.b16 %v231
        %v244 = vunpack.c.l.b16 %v232
        %v245 = vunpack.c.l.b16 %v233
        %v246 = vunpack.c.l.b16 %v234
        %v247 = vpack.c.b16 %v244, %v243
        %v248 = vpack.c.b16 %v246, %v245
        %v252 = vsel %vm207, %v230, 0
        %254 = vmatpush.bf16.msra.mxu0 0
        %255 = vmatpush.bf16.msra.mxu0 0
        %256 = vmatpush.bf16.msra.mxu0 0
        %257 = vmatpush.bf16.msra.mxu0 0
        %258 = vmatpush.bf16.msra.mxu0 0
        %259 = vmatpush.bf16.msra.mxu0 0
        %260 = vmatpush.bf16.msra.mxu0 %v248
        %261 = vmatpush.bf16.msra.mxu0 %v247
        %262 = vmatmul.bf16.gmra.mxu0 %v252
        %v263 = vpop.f32.mrf.mxu0
        %v264 = vadd.f32 %v237, %v263
        %v265 = vpop.f32.mrf.mxu0
        %266 = vdwg.mxu0
        %v267 = vadd.f32 %v206, %v264
        %268 = vst.msk [vmem:[%s204] sm:$0xff] %vm207, %v267
        %s269 = sand.u32 %s97, 1
        %s270 = scalar_lea.sflag [#allocation4], %s269
        %s271 = sand.u32 %s97, 1
        %s272 = smul.addr %s271, 8
        %s273 = scalar_lea.vmem [#allocation7], %s272
        // Predicated region
        $region41: #{layer_scale_forward.1} parent=31 // pred_check
          %p274 = pneg %p107
        $region42: #{layer_scale_forward.1} parent=31 // pred_check_branch
          %276 = sbr.rel (%p274) target = $region44
        $region43: #{layer_scale_forward.1} parent=31 // pred_region
          %278 = vsyncadd %s270, 0
          %s279 = smul.addr %s21, 8
          %s280 = scalar_lea.hbm %s3, %s279
          %s282 = sshll.u32 %s273, 4
          %s283 = int_to_ptr.vmem [resolvable:$true] %s282
          %s284 = sshll.u32 %s280, 4
          %s285 = int_to_ptr.hbm [resolvable:$true] %s284
          %287 = dma.vmem_to_hbm [thread:$0]  %s283, 128, %s285, %s270
        $region44: #{layer_scale_forward.1} parent=31 // pred_fallthru
          _
      $region32: #{layer_scale_forward.1} parent=5 // pred_fallthru
        _
      %p288 = scmp.le.s32.totalorder 2, %s16
      // Predicated region
      $region45: #{layer_scale_forward.1} parent=5 // pred_check
        %p289 = pneg %p288
      $region46: #{layer_scale_forward.1} parent=5 // pred_check_branch
        %291 = sbr.rel (%p289) target = $region48
      $region47: #{layer_scale_forward.1} parent=5 // pred_region
        %s292 = ssub.s32 %s16, 2
        // Predicated region
        $region49: #{layer_scale_forward.1} parent=47 // pred_check
          %p293 = pneg %p113
        $region50: #{layer_scale_forward.1} parent=47 // pred_check_branch
          %295 = sbr.rel (%p293) target = $region52
        $region51: #{layer_scale_forward.1} parent=47 // pred_region
          %s296 = sand.u32 %s98, 1
          %s297 = scalar_lea.sflag [#allocation4], %s296
          %s298 = sand.u32 %s98, 1
          %s299 = smul.addr %s298, 8
          %s300 = scalar_lea.vmem [#allocation7], %s299
          %302 = dma.done %s297, 128
        $region52: #{layer_scale_forward.1} parent=47 // pred_fallthru
          _
      $region48: #{layer_scale_forward.1} parent=5 // pred_fallthru
        _
    $region6: #{layer_scale_forward.1} parent=1 // loop_footer
      %s20 = sadd.s32 1, %s16
    $region7: #{layer_scale_forward.1} parent=1 // loop_footer_branch
      %15 = sbr.rel target = $region3
    $region8: #{layer_scale_forward.1} parent=1 // loop_exit
      _
    %303 = vsyncpa [#allocation3], 1
    %s304 = scalar_lea.sflag [#allocation3], 1
    %305 = vsyncpa %s304, 1
    %306 = vsyncpa [#allocation6], 1
    %307 = vsyncpa [#allocation4], 1
    %s308 = scalar_lea.sflag [#allocation4], 1
    %309 = vsyncpa %s308, 1

</llo_original>
